<compile_context>
chip_gen: v6e
topology: v6e:2x2x1
jax: 0.10.0
libtpu: 0.0.40
codegen_flags: <defaults>
</compile_context>

<pallas_src>
import math

import numpy as np
import jax
import jax.numpy as jnp
from jax.experimental import pallas as pl
from jax.experimental.pallas import tpu as pltpu


# ----------------------------------------------------------------------------
# Interpolation matrices (torch.nn.functional.interpolate semantics,
# align_corners=False, recompute_scale_factor=None, out = floor(in*scale)).
# Built with numpy on the host and cached -> no per-call XLA scatter ops.
# ----------------------------------------------------------------------------
def _bilinear_matrix_np(in_size: int, out_size: int, scale: float) -> np.ndarray:
    r = 1.0 / scale                       # torch uses the user scale_factor directly
    i = np.arange(out_size, dtype=np.float64)
    src = np.maximum(r * (i + 0.5) - 0.5, 0.0)
    i0 = np.clip(np.floor(src).astype(np.int64), 0, in_size - 1)
    i1 = np.minimum(i0 + 1, in_size - 1)
    w1 = src - i0
    w0 = 1.0 - w1
    P = np.zeros((out_size, in_size), np.float64)
    rows = np.arange(out_size)
    np.add.at(P, (rows, i0), w0)
    np.add.at(P, (rows, i1), w1)
    return P


def _nearest_matrix_np(in_size: int, out_size: int, scale: float) -> np.ndarray:
    r = 1.0 / scale
    i = np.arange(out_size, dtype=np.float64)
    src = np.minimum(np.floor(i * r).astype(np.int64), in_size - 1)
    P = np.zeros((out_size, in_size), np.float64)
    P[np.arange(out_size), src] = 1.0
    return P


# ----------------------------------------------------------------------------
# Fused Pallas kernel: (resize over all stages) + (optional 1x1 conv) per batch.
# ----------------------------------------------------------------------------
def _fused_kernel(k_ref, pwt_ref, b_ref, x_ref, o_ref):
    # k_ref  : (tr, C*H)   rows of kron(Wconv, Ph_total)  (or kron(I_C, Ph_total))
    # pwt_ref: (W, Wo)     Pw_total^T
    # b_ref  : (tr, 1)     per-output-row bias (conv bias repeated Ho times, or zeros)
    # x_ref  : (1, C*H, W) one batch element, channels folded into the sublane axis
    # o_ref  : (1, tr, Wo)
    r = jnp.dot(k_ref[...], x_ref[0], preferred_element_type=jnp.float32)    # (tr, W)
    y = jnp.dot(r, pwt_ref[...], preferred_element_type=jnp.float32)         # (tr, Wo)
    o_ref[0] = (y + b_ref[...]).astype(o_ref.dtype)


def _choose_row_tile(R: int) -> int:
    # Largest divisor of R that is a multiple of 8 and <= 512 (bounds VMEM for big
    # feature maps and gives megacore >=2 steps when it matters); else the full dim.
    if R % 8 != 0:
        return R
    for tr in range(min(R, 512), 0, -8):
        if R % tr == 0:
            return tr
    return R


def _fused_forward(x2, K, pwt, bcol, row_tile):
    # x2: (N, C*H, W); K: (R, C*H); pwt: (W, Wo); bcol: (R, 1)
    N, CH, W = x2.shape
    R = K.shape[0]
    Wo = pwt.shape[1]
    n_rt = R // row_tile
    return pl.pallas_call(
        _fused_kernel,
        out_shape=jax.ShapeDtypeStruct((N, R, Wo), x2.dtype),
        grid=(N, n_rt),
        in_specs=[
            pl.BlockSpec((row_tile, CH), lambda n, j: (j, 0)),
            pl.BlockSpec((W, Wo), lambda n, j: (0, 0)),
            pl.BlockSpec((row_tile, 1), lambda n, j: (j, 0)),
            pl.BlockSpec((1, CH, W), lambda n, j: (n, 0, 0)),   # constant across j -> DMA'd once
        ],
        out_specs=pl.BlockSpec((1, row_tile, Wo), lambda n, j: (n, j, 0)),
        compiler_params=pltpu.CompilerParams(
            dimension_semantics=("parallel", "parallel")),
    )(K, pwt, bcol, x2)


# ----------------------------------------------------------------------------
# Module wrapper
# ----------------------------------------------------------------------------
class SpatialRescalerPallas:
    def __init__(self, n_stages=1, method='bilinear', multiplier=0.5,
                 in_channels=3, out_channels=None, bias=False, key=None):
        assert n_stages >= 0
        assert method in ['nearest', 'linear', 'bilinear', 'trilinear', 'bicubic', 'area']
        if method not in ('bilinear', 'nearest'):
            # TODO(synk): 'linear'/'trilinear'/'bicubic'/'area' interpolation matrices not implemented.
            raise NotImplementedError(method)
        self.n_stages = n_stages
        self.method = method
        self.multiplier = multiplier
        self.in_channels = in_channels
        self.out_channels = out_channels
        self.remap_output = out_channels is not None
        if self.remap_output:
            key = jax.random.PRNGKey(0) if key is None else key
            kw, kb = jax.random.split(key)
            bound = 1.0 / math.sqrt(in_channels)  # nn.Conv2d default init range
            # Conv2d(in, out, 1) weight is (out, in, 1, 1); keep the (out, in) core.
            self.weight = jax.random.uniform(kw, (out_channels, in_channels),
                                             jnp.float32, -bound, bound)
            if bias:
                self.bias = jax.random.uniform(kb, (out_channels,), jnp.float32,
                                               -bound, bound)
            else:
                self.bias = jnp.zeros((out_channels,), jnp.float32)
        self._cache = {}

    def _interp_np(self, in_size, out_size):
        if self.method == 'bilinear':
            return _bilinear_matrix_np(in_size, out_size, self.multiplier)
        return _nearest_matrix_np(in_size, out_size, self.multiplier)

    def _build_constants(self, C, H, W, dtype):
        key = (C, H, W, str(dtype))
        if key in self._cache:
            return self._cache[key]
        # Compose per-stage interpolation matrices (per-stage floor() sizing preserved).
        Ph = np.eye(H, dtype=np.float64)
        Pw = np.eye(W, dtype=np.float64)
        h, w = H, W
        for _ in range(self.n_stages):
            ho = int(math.floor(h * self.multiplier))
            wo = int(math.floor(w * self.multiplier))
            assert ho > 0 and wo > 0, "interpolation output size collapsed to 0"
            Ph = self._interp_np(h, ho) @ Ph
            Pw = self._interp_np(w, wo) @ Pw
            h, w = ho, wo
        if self.remap_output:
            assert C == self.in_channels, (C, self.in_channels)
            Wmat = np.asarray(self.weight, np.float64)             # (Co, Ci)
            K = np.kron(Wmat, Ph)                                  # (Co*Ho, Ci*H)
            bcol = np.repeat(np.asarray(self.bias, np.float64), h)[:, None]
            c_out = self.out_channels
        else:
            K = np.kron(np.eye(C), Ph)                             # (C*Ho, C*H)
            bcol = np.zeros((C * h, 1), np.float64)
            c_out = C
        np_dtype = np.dtype(dtype)  # keep bf16 inputs bf16 end-to-end (f32 MXU accumulation)
        consts = (jnp.asarray(K, np_dtype), jnp.asarray(Pw.T, np_dtype),
                  jnp.asarray(bcol, np_dtype), c_out, h, w)
        self._cache[key] = consts
        return consts

    def __call__(self, x):
        N, C, H, W = x.shape
        if self.n_stages == 0 and not self.remap_output:
            return x
        K, PwT, bcol, c_out, Ho, Wo = self._build_constants(C, H, W, x.dtype)
        x2 = x.reshape(N, C * H, W)                 # contiguous merge: free metadata reshape
        tr = _choose_row_tile(K.shape[0])
        y2 = _fused_forward(x2, K, PwT, bcol, tr)   # (N, c_out*Ho, Wo)
        return y2.reshape(N, c_out, Ho, Wo)         # contiguous split: free

    def encode(self, x):
        return self(x)


# ----------------------------------------------------------------------------
# Demo / self-check
# ----------------------------------------------------------------------------
if __name__ == "__main__":
    key = jax.random.PRNGKey(0)
    kx, kp = jax.random.split(key)
    N, Cin, H, W = 2, 4, 16, 16
    Cout = 8
    n_stages = 2

    x = jax.random.normal(kx, (N, Cin, H, W), jnp.float32)

    # --- bilinear, 2 stages, with 1x1 channel mapper (fused) ---
    model = SpatialRescalerPallas(n_stages=n_stages, method='bilinear',
                                  multiplier=0.5, in_channels=Cin,
                                  out_channels=Cout, bias=False, key=kp)
    out = jax.block_until_ready(model(x))

    # Reference: torch bilinear downscale by exactly 0.5 (align_corners=False)
    # equals 2x2 mean pooling, followed by the 1x1 conv.
    ref = x
    for _ in range(n_stages):
        n, c, h, w = ref.shape
        ref = ref.reshape(n, c, h // 2, 2, w // 2, 2).mean(axis=(3, 5))
    ref = jnp.einsum('nchw,oc->nohw', ref, model.weight) + model.bias[None, :, None, None]

    assert out.shape == ref.shape, (out.shape, ref.shape)
    assert jnp.allclose(out, ref, atol=1e-5, rtol=1e-5), float(jnp.max(jnp.abs(out - ref)))

    # --- nearest, 1 stage, no channel mapper ---
    model2 = SpatialRescalerPallas(n_stages=1, method='nearest',
                                   multiplier=0.5, in_channels=Cin)
    out2 = jax.block_until_ready(model2(x))
    ref2 = x[:, :, ::2, ::2]
    assert out2.shape == ref2.shape, (out2.shape, ref2.shape)
    assert jnp.allclose(out2, ref2, atol=1e-6, rtol=1e-6), float(jnp.max(jnp.abs(out2 - ref2)))

    print("KERNEL_OK")
</pallas_src>

<mosaic_0001>
module attributes {stable_mosaic.version = 11 : i64} {
  func.func @_fused_kernel(%arg0: i32, %arg1: i32, %arg2: memref<32x64xf32, #tpu.memory_space<vmem>>, %arg3: memref<16x4xf32, #tpu.memory_space<vmem>>, %arg4: memref<32x1xf32, #tpu.memory_space<vmem>>, %arg5: memref<1x64x16xf32, #tpu.memory_space<vmem>>, %arg6: memref<1x32x4xf32, #tpu.memory_space<vmem>>) attributes {dimension_semantics = [#tpu.dimension_semantics<parallel>, #tpu.dimension_semantics<parallel>], iteration_bounds = array<i64: 2, 1>, scalar_prefetch = 0 : i64, scratch_operands = 0 : i64, tpu.core_type = #tpu.core_type<tc>, window_params = [{transform_indices = @transform_0, window_bounds = array<i64: 32, 64>}, {pipeline_mode = #tpu.pipeline_mode<synchronous>, transform_indices = @transform_1, window_bounds = array<i64: 16, 4>}, {transform_indices = @transform_2, window_bounds = array<i64: 32, 1>}, {transform_indices = @transform_3, window_bounds = array<i64: 1, 64, 16>}, {transform_indices = @transform_4, window_bounds = array<i64: 1, 32, 4>}]} {
    %c0 = arith.constant 0 : index
    %c0_0 = arith.constant 0 : index
    %0 = vector.load %arg2[%c0, %c0_0] : memref<32x64xf32, #tpu.memory_space<vmem>>, vector<32x64xf32>
    %c0_1 = arith.constant 0 : index
    %c0_2 = arith.constant 0 : index
    %c0_3 = arith.constant 0 : index
    %1 = vector.load %arg5[%c0_1, %c0_2, %c0_3] : memref<1x64x16xf32, #tpu.memory_space<vmem>>, vector<1x64x16xf32>
    %2 = vector.shape_cast %1 : vector<1x64x16xf32> to vector<64x16xf32>
    %cst = arith.constant dense<0.000000e+00> : vector<32x16xf32>
    %3 = tpu.matmul %0, %2, %cst {dimension_numbers = #tpu.dot_dimension_numbers<[1], [0], [0], [1], [0, 0, 1, 1], [], []>} : vector<32x64xf32>, vector<64x16xf32>, vector<32x16xf32> -> vector<32x16xf32>
    %c0_4 = arith.constant 0 : index
    %c0_5 = arith.constant 0 : index
    %4 = vector.load %arg3[%c0_4, %c0_5] : memref<16x4xf32, #tpu.memory_space<vmem>>, vector<16x4xf32>
    %cst_6 = arith.constant dense<0.000000e+00> : vector<32x4xf32>
    %5 = tpu.matmul %3, %4, %cst_6 {dimension_numbers = #tpu.dot_dimension_numbers<[1], [0], [0], [1], [0, 0, 1, 1], [], []>} : vector<32x16xf32>, vector<16x4xf32>, vector<32x4xf32> -> vector<32x4xf32>
    %c0_7 = arith.constant 0 : index
    %c0_8 = arith.constant 0 : index
    %6 = vector.load %arg4[%c0_7, %c0_8] : memref<32x1xf32, #tpu.memory_space<vmem>>, vector<32x1xf32>
    %7 = vector.broadcast %6 : vector<32x1xf32> to vector<32x4xf32>
    %8 = arith.addf %5, %7 : vector<32x4xf32>
    %c0_9 = arith.constant 0 : index
    %c0_10 = arith.constant 0 : index
    %c0_11 = arith.constant 0 : index
    %9 = vector.load %arg6[%c0_9, %c0_10, %c0_11] : memref<1x32x4xf32, #tpu.memory_space<vmem>>, vector<1x32x4xf32>
    %10 = vector.shape_cast %9 : vector<1x32x4xf32> to vector<32x4xf32>
    %11 = vector.shape_cast %8 : vector<32x4xf32> to vector<1x32x4xf32>
    tpu.vector_store %arg6[%c0_9, %c0_10, %c0_11], %11 {strides = array<i32>} : memref<1x32x4xf32, #tpu.memory_space<vmem>>, vector<1x32x4xf32>,
    return
  }
  func.func @transform_0(%arg0: i32, %arg1: i32) -> (i32, i32) {
    %c0_i32 = arith.constant 0 : i32
    %c0_i32_0 = arith.constant 0 : i32
    return %arg1, %c0_i32 : i32, i32
  }
  func.func @transform_1(%arg0: i32, %arg1: i32) -> (i32, i32) {
    %c0_i32 = arith.constant 0 : i32
    %c0_i32_0 = arith.constant 0 : i32
    %c0_i32_1 = arith.constant 0 : i32
    return %c0_i32, %c0_i32_0 : i32, i32
  }
  func.func @transform_2(%arg0: i32, %arg1: i32) -> (i32, i32) {
    %c0_i32 = arith.constant 0 : i32
    %c0_i32_0 = arith.constant 0 : i32
    return %arg1, %c0_i32 : i32, i32
  }
  func.func @transform_3(%arg0: i32, %arg1: i32) -> (i32, i32, i32) {
    %c0_i32 = arith.constant 0 : i32
    %c0_i32_0 = arith.constant 0 : i32
    %c0_i32_1 = arith.constant 0 : i32
    return %arg0, %c0_i32, %c0_i32_0 : i32, i32, i32
  }
  func.func @transform_4(%arg0: i32, %arg1: i32) -> (i32, i32, i32) {
    %c0_i32 = arith.constant 0 : i32
    %c0_i32_0 = arith.constant 0 : i32
    return %arg0, %arg1, %c0_i32 : i32, i32, i32
  }
}

</mosaic_0001>

<llo_original>
// kernel: tpu_custom_call.1
$region0: #{tpu_custom_call.1}
  #allocation0 [shape = 'u32[]', space=smem, size = 0x4, offset = 0x4, fixed_abs, tag = 'smem constant byte address 0x4 - core index']
  #allocation1 [shape = 'u32[144,128]{1,0:T(1,128)}', space=vmem, size = 0x12000, scoped, tag = 'internal scratch']
  %s0 = inlined_call_operand.vmem [shape: f32[32,64], index: 0, kind: input, shape index: {}]
  %s1 = inlined_call_operand.vmem [shape: f32[16,4], index: 1, kind: input, shape index: {}]
  %s2 = inlined_call_operand.vmem [shape: f32[32,1], index: 2, kind: input, shape index: {}]
  %s3 = inlined_call_operand.vmem [shape: f32[2,64,16], index: 3, kind: input, shape index: {}]
  %s4 = inlined_call_operand.vmem [shape: f32[2,32,4], index: 4, kind: output, shape index: {}]
  %s5 = sld [smem:[#allocation0]]
  $region49: #{tpu_custom_call.1} parent=0
    _
  %s7 = ssub.s32 1, %s5
  %s8 = scalar_select 0, %s7, %s5
  loop: start=0, step=1, limit=4
  $region2: #{tpu_custom_call.1} parent=0 // loop_pre_header
    _
  $region3: #{tpu_custom_call.1} parent=0 // loop_header
    %s10 = sphi 0, %s14
    %p11 = scmp.ge.s32.totalorder %s10, 4
    %s17 = sphi 0, %s29
    %s18 = sphi 0, %s25
    %s19 = sphi 0, %s17
    %s20 = sphi 0, %s18
    %s21 = sphi 0, %s19
    %s22 = sphi 0, %s20
    %s32 = sphi 0, %s34
    %s35 = sphi 0, %s32
    %s36 = sphi 0, %s35
    %s52 = sphi 0, %s36
    %s56 = sphi 0, %s56
    %s58 = sphi 0, %s56
    %s59 = sphi 0, %s58
    %s73 = sphi 0, %s59
    %s79 = sphi 0, %s81
    %s82 = sphi 0, %s79
    %s83 = sphi 0, %s82
    %s99 = sphi 0, %s83
    %s105 = sphi 0, %s107
    %s108 = sphi 0, %s105
    %s109 = sphi 0, %s108
    %s125 = sphi 0, %s109
    %s133 = sphi 0, %s135
    %s136 = sphi 0, %s133
    %s137 = sphi 0, %s136
    %s153 = sphi 0, %s137
  $region4: #{tpu_custom_call.1} parent=0 // loop_header_branch
    %13 = sbr.rel (%p11) target = $region8
  $region5: #{tpu_custom_call.1} parent=0 // loop_body
    %s15 = ssub.s32 %s10, 1
    %s16 = ssub.s32 %s10, 2
    %s23 = sadd.s32 1, %s18
    %p24 = scmp.ge.s32.totalorder %s23, 1
    %s25 = scalar_select %p24, 0, %s23
    %s26 = sadd.s32 1, %s17
    %s27 = scalar_select %p24, %s26, %s17
    %p28 = scmp.ge.s32.totalorder %s27, 2
    %s29 = scalar_select %p28, 0, %s27
    %s30 = ssub.s32 %s18, %s25
    %p31 = scmp.eq.s32.totalorder %s30, 0
    %s33 = sadd.s32 %s32, 1
    %s34 = scalar_select %p31, %s32, %s33
    %p37 = pneg %p31
    %p38 = scmp.eq.s32.totalorder %s10, 1
    %p39 = por %p37, %p38
    %p40 = scmp.ne.s32.totalorder %s32, %s35
    %p41 = scmp.eq.s32.totalorder %s10, 0
    %p42 = por %p40, %p41
    %p43 = scmp.ne.s32.totalorder %s32, %s35
    %p44 = scmp.eq.s32.totalorder %s15, 1
    %p45 = por %p43, %p44
    %p46 = scmp.ne.s32.totalorder %s35, %s36
    %p47 = scmp.eq.s32.totalorder %s15, 0
    %p48 = por %p46, %p47
    %p49 = scmp.ne.s32.totalorder %s35, %s36
    %p50 = scmp.eq.s32.totalorder %s16, 1
    %p51 = por %p49, %p50
    %p53 = scmp.ne.s32.totalorder %s36, %s52
    %p54 = scmp.eq.s32.totalorder %s16, 0
    %p55 = por %p53, %p54
    %s57 = sadd.s32 %s56, 1
    %p60 = scmp.eq.s32.totalorder %s10, 1
    %p61 = scmp.ne.s32.totalorder %s56, %s58
    %p62 = scmp.eq.s32.totalorder %s10, 0
    %p63 = por %p61, %p62
    %p64 = scmp.ne.s32.totalorder %s56, %s58
    %p65 = scmp.eq.s32.totalorder %s15, 1
    %p66 = por %p64, %p65
    %p67 = scmp.ne.s32.totalorder %s58, %s59
    %p68 = scmp.eq.s32.totalorder %s15, 0
    %p69 = por %p67, %p68
    %p70 = scmp.ne.s32.totalorder %s58, %s59
    %p71 = scmp.eq.s32.totalorder %s16, 1
    %p72 = por %p70, %p71
    %p74 = scmp.ne.s32.totalorder %s59, %s73
    %p75 = scmp.eq.s32.totalorder %s16, 0
    %p76 = por %p74, %p75
    %s77 = ssub.s32 %s18, %s25
    %p78 = scmp.eq.s32.totalorder %s77, 0
    %s80 = sadd.s32 %s79, 1
    %s81 = scalar_select %p78, %s79, %s80
    %p84 = pneg %p78
    %p85 = scmp.eq.s32.totalorder %s10, 1
    %p86 = por %p84, %p85
    %p87 = scmp.ne.s32.totalorder %s79, %s82
    %p88 = scmp.eq.s32.totalorder %s10, 0
    %p89 = por %p87, %p88
    %p90 = scmp.ne.s32.totalorder %s79, %s82
    %p91 = scmp.eq.s32.totalorder %s15, 1
    %p92 = por %p90, %p91
    %p93 = scmp.ne.s32.totalorder %s82, %s83
    %p94 = scmp.eq.s32.totalorder %s15, 0
    %p95 = por %p93, %p94
    %p96 = scmp.ne.s32.totalorder %s82, %s83
    %p97 = scmp.eq.s32.totalorder %s16, 1
    %p98 = por %p96, %p97
    %p100 = scmp.ne.s32.totalorder %s83, %s99
    %p101 = scmp.eq.s32.totalorder %s16, 0
    %p102 = por %p100, %p101
    %s103 = ssub.s32 %s17, %s29
    %p104 = scmp.eq.s32.totalorder %s103, 0
    %s106 = sadd.s32 %s105, 1
    %s107 = scalar_select %p104, %s105, %s106
    %p110 = pneg %p104
    %p111 = scmp.eq.s32.totalorder %s10, 1
    %p112 = por %p110, %p111
    %p113 = scmp.ne.s32.totalorder %s105, %s108
    %p114 = scmp.eq.s32.totalorder %s10, 0
    %p115 = por %p113, %p114
    %p116 = scmp.ne.s32.totalorder %s105, %s108
    %p117 = scmp.eq.s32.totalorder %s15, 1
    %p118 = por %p116, %p117
    %p119 = scmp.ne.s32.totalorder %s108, %s109
    %p120 = scmp.eq.s32.totalorder %s15, 0
    %p121 = por %p119, %p120
    %p122 = scmp.ne.s32.totalorder %s108, %s109
    %p123 = scmp.eq.s32.totalorder %s16, 1
    %p124 = por %p122, %p123
    %p126 = scmp.ne.s32.totalorder %s109, %s125
    %p127 = scmp.eq.s32.totalorder %s16, 0
    %p128 = por %p126, %p127
    %s129 = ssub.s32 %s17, %s29
    %s130 = ssub.s32 %s18, %s25
    %s131 = sor.u32 %s129, %s130
    %p132 = scmp.eq.s32.totalorder %s131, 0
    %s134 = sadd.s32 %s133, 1
    %s135 = scalar_select %p132, %s133, %s134
    %p138 = pneg %p132
    %p139 = scmp.eq.s32.totalorder %s10, 1
    %p140 = por %p138, %p139
    %p141 = scmp.ne.s32.totalorder %s133, %s136
    %p142 = scmp.eq.s32.totalorder %s10, 0
    %p143 = por %p141, %p142
    %p144 = scmp.ne.s32.totalorder %s133, %s136
    %p145 = scmp.eq.s32.totalorder %s15, 1
    %p146 = por %p144, %p145
    %p147 = scmp.ne.s32.totalorder %s136, %s137
    %p148 = scmp.eq.s32.totalorder %s15, 0
    %p149 = por %p147, %p148
    %p150 = scmp.ne.s32.totalorder %s136, %s137
    %p151 = scmp.eq.s32.totalorder %s16, 1
    %p152 = por %p150, %p151
    %p154 = scmp.ne.s32.totalorder %s137, %s153
    %p155 = scmp.eq.s32.totalorder %s16, 0
    %p156 = por %p154, %p155
    %p157 = scmp.le.s32.totalorder 1, %s10
    %p158 = scmp.lt.s32.totalorder %s10, 3
    %p159 = pnand %p157, %p158
    %p160 = pneg %p159
    // Predicated region
    $region9: #{tpu_custom_call.1} parent=5 // pred_check
      _
    $region10: #{tpu_custom_call.1} parent=5 // pred_check_branch
      %162 = sbr.rel (%p159) target = $region12
    $region11: #{tpu_custom_call.1} parent=5 // pred_region
      %s163 = ssub.s32 %s10, 1
      // Predicated region
      $region13: #{tpu_custom_call.1} parent=11 // pred_check
        %p164 = pneg %p48
      $region14: #{tpu_custom_call.1} parent=11 // pred_check_branch
        %166 = sbr.rel (%p164) target = $region16
      $region15: #{tpu_custom_call.1} parent=11 // pred_region
        %s167 = smul.u32 4, %s20
        %p168 = scmp.lt.s32.totalorder %s167, 3
        %s169 = scalar_select %p168, %s167, 3
        %s170 = smul.addr %s169, 8
        %s171 = scalar_lea.vmem %s0, %s170
        %s172 = smul.u32 4, %s20
      $region16: #{tpu_custom_call.1} parent=11 // pred_fallthru
        _
      // Predicated region
      $region17: #{tpu_custom_call.1} parent=11 // pred_check
        %p173 = pneg %p69
      $region18: #{tpu_custom_call.1} parent=11 // pred_check_branch
        %175 = sbr.rel (%p173) target = $region20
      $region19: #{tpu_custom_call.1} parent=11 // pred_region
        _
      $region20: #{tpu_custom_call.1} parent=11 // pred_fallthru
        _
      // Predicated region
      $region21: #{tpu_custom_call.1} parent=11 // pred_check
        %p176 = pneg %p95
      $region22: #{tpu_custom_call.1} parent=11 // pred_check_branch
        %178 = sbr.rel (%p176) target = $region24
      $region23: #{tpu_custom_call.1} parent=11 // pred_region
        %s179 = smul.u32 4, %s20
        %p180 = scmp.lt.s32.totalorder %s179, 3
        %s181 = scalar_select %p180, %s179, 3
        %s182 = smul.addr %s181, 8
        %s183 = scalar_lea.vmem %s2, %s182
        %s184 = smul.u32 4, %s20
      $region24: #{tpu_custom_call.1} parent=11 // pred_fallthru
        _
    $region12: #{tpu_custom_call.1} parent=5 // pred_fallthru
      _
    %p185 = scmp.lt.s32.totalorder %s10, 2
    // Predicated region
    $region25: #{tpu_custom_call.1} parent=5 // pred_check
      %p186 = pneg %p185
    $region26: #{tpu_custom_call.1} parent=5 // pred_check_branch
      %188 = sbr.rel (%p186) target = $region28
    $region27: #{tpu_custom_call.1} parent=5 // pred_region
      // Predicated region
      $region29: #{tpu_custom_call.1} parent=27 // pred_check
        %p189 = pneg %p115
      $region30: #{tpu_custom_call.1} parent=27 // pred_check_branch
        %191 = sbr.rel (%p189) target = $region32
      $region31: #{tpu_custom_call.1} parent=27 // pred_region
        %p192 = scmp.lt.s32.totalorder %s17, 1
        %s193 = scalar_select %p192, %s17, 1
        %s194 = smul.addr %s193, 8
        %s195 = smul.addr %s194, 8
        %s196 = scalar_lea.vmem %s3, %s195
      $region32: #{tpu_custom_call.1} parent=27 // pred_fallthru
        _
    $region28: #{tpu_custom_call.1} parent=5 // pred_fallthru
      _
    %p197 = scmp.le.s32.totalorder 1, %s10
    %p198 = scmp.lt.s32.totalorder %s10, 3
    %p199 = pnand %p197, %p198
    %p200 = pneg %p199
    // Predicated region
    $region33: #{tpu_custom_call.1} parent=5 // pred_check
      _
    $region34: #{tpu_custom_call.1} parent=5 // pred_check_branch
      %202 = sbr.rel (%p199) target = $region36
    $region35: #{tpu_custom_call.1} parent=5 // pred_region
      %s203 = ssub.s32 %s10, 1
      %s204 = smul.u32 4, %s20
      %p205 = scmp.lt.s32.totalorder %s204, 3
      %s206 = scalar_select %p205, %s204, 3
      %s207 = smul.addr %s206, 8
      %s208 = scalar_lea.vmem %s0, %s207
      %p209 = pneg %p48
      %p210 = pneg %p45
      %p211 = pneg %p69
      %p212 = pneg %p66
      %s213 = smul.u32 4, %s20
      %p214 = scmp.lt.s32.totalorder %s213, 3
      %s215 = scalar_select %p214, %s213, 3
      %s216 = smul.addr %s215, 8
      %s217 = scalar_lea.vmem %s2, %s216
      %p218 = pneg %p95
      %p219 = pneg %p92
      %p220 = scmp.lt.s32.totalorder %s19, 1
      %s221 = scalar_select %p220, %s19, 1
      %s222 = smul.addr %s221, 8
      %s223 = smul.addr %s222, 8
      %s224 = scalar_lea.vmem %s3, %s223
      %p225 = pneg %p121
      %p226 = pneg %p118
      %p227 = pneg %p149
      %p228 = pneg %p146
      %s229 = smul.u32 4, %s20
      %p230 = scmp.lt.s32.totalorder %s19, 1
      %s231 = scalar_select %p230, %s19, 1
      %p232 = scmp.lt.s32.totalorder %s229, 3
      %s233 = scalar_select %p232, %s229, 3
      %s234 = smul.addr %s231, 4
      %s235 = sadd.s32 %s233, %s234
      %s236 = smul.addr %s235, 8
      %s237 = scalar_lea.vmem %s4, %s236
      %s238 = smul.u32 4, %s20
      %p239 = scmp.lt.s32.totalorder %s238, 3
      %s240 = scalar_select %p239, %s238, 3
      %s241 = smul.addr %s240, 8
      %s242 = scalar_lea.vmem %s0, %s241
      %s243 = smul.u32 4, %s20
      %s244 = smul.u32 4, %s20
      %p245 = scmp.lt.s32.totalorder %s244, 3
      %s246 = scalar_select %p245, %s244, 3
      %s247 = smul.addr %s246, 8
      %s248 = scalar_lea.vmem %s2, %s247
      %s249 = smul.u32 4, %s20
      %p250 = scmp.lt.s32.totalorder %s19, 1
      %s251 = scalar_select %p250, %s19, 1
      %s252 = smul.addr %s251, 8
      %s253 = smul.addr %s252, 8
      %s254 = scalar_lea.vmem %s3, %s253
      %s255 = smul.u32 4, %s20
      %p256 = scmp.lt.s32.totalorder %s19, 1
      %s257 = scalar_select %p256, %s19, 1
      %p258 = scmp.lt.s32.totalorder %s255, 3
      %s259 = scalar_select %p258, %s255, 3
      %s260 = smul.addr %s257, 4
      %s261 = sadd.s32 %s259, %s260
      %s262 = smul.addr %s261, 8
      %s263 = scalar_lea.vmem %s4, %s262
      %s264 = smul.u32 4, %s20
      %v265 = vld [vmem:[%s242] sm:$0xff]
      %v266 = vld [vmem:[%s242 + $0x8] sm:$0xff]
      %v267 = vld [vmem:[%s242 + $0x10] sm:$0xff]
      %v268 = vld [vmem:[%s242 + $0x18] sm:$0xff]
      %v269 = vld [vmem:[%s254] sm:$0xff]
      %v270 = vld [vmem:[%s254 + $0x8] sm:$0xff]
      %v271 = vld [vmem:[%s254 + $0x10] sm:$0xff]
      %v272 = vld [vmem:[%s254 + $0x18] sm:$0xff]
      %v273 = vld [vmem:[%s254 + $0x20] sm:$0xff]
      %v274 = vld [vmem:[%s254 + $0x28] sm:$0xff]
      %v275 = vld [vmem:[%s254 + $0x30] sm:$0xff]
      %v276 = vld [vmem:[%s254 + $0x38] sm:$0xff]
      %vm277 = vcmask 523264
      %v279 = vsel %vm277, %v265, 0
      %v282 = vsel %vm277, %v266, 0
      %v285 = vsel %vm277, %v267, 0
      %v288 = vsel %vm277, %v268, 0
      %290 = vmatprep.subr.mxu0 0.0
      %291 = vmatpush1.msra.mxu0 0.0
      %292 = vmatprep.subr.mxu0 0.0
      %293 = vmatpush1.msra.mxu0 0.0
      %294 = vmatprep.subr.mxu0 0.0
      %295 = vmatpush1.msra.mxu0 0.0
      %296 = vmatprep.subr.mxu0 0.0
      %297 = vmatpush1.msra.mxu0 0.0
      %298 = vmatprep.subr.mxu0 0.0
      %299 = vmatpush1.msra.mxu0 0.0
      %300 = vmatprep.subr.mxu0 0.0
      %301 = vmatpush1.msra.mxu0 0.0
      %302 = vmatprep.subr.mxu0 0.0
      %303 = vmatpush1.msra.mxu0 0.0
      %304 = vmatprep.subr.mxu0 0.0
      %305 = vmatpush1.msra.mxu0 0.0
      %306 = vmatprep.subr.mxu0 0.0
      %307 = vmatpush1.msra.mxu0 %v276
      %308 = vmatprep.subr.mxu0 0.0
      %309 = vmatpush1.msra.mxu0 %v275
      %310 = vmatprep.subr.mxu0 0.0
      %311 = vmatpush1.msra.mxu0 %v274
      %312 = vmatprep.subr.mxu0 0.0
      %313 = vmatpush1.msra.mxu0 %v273
      %314 = vmatprep.subr.mxu0 0.0
      %315 = vmatpush1.msra.mxu0 %v272
      %316 = vmatprep.subr.mxu0 0.0
      %317 = vmatpush1.msra.mxu0 %v271
      %318 = vmatprep.subr.mxu0 0.0
      %319 = vmatpush1.msra.mxu0 %v270
      %320 = vmatprep.subr.mxu0 0.0
      %321 = vmatpush1.msra.mxu0 %v269
      %322 = vmatprep.subr.mxu0 0.0
      %323 = vmatpush2.msra.mxu0 0.0
      %324 = vmatprep.subr.mxu0 0.0
      %325 = vmatpush2.msra.mxu0 0.0
      %326 = vmatprep.subr.mxu0 0.0
      %327 = vmatpush2.msra.mxu0 0.0
      %328 = vmatprep.subr.mxu0 0.0
      %329 = vmatpush2.msra.mxu0 0.0
      %330 = vmatprep.subr.mxu0 0.0
      %331 = vmatpush2.msra.mxu0 0.0
      %332 = vmatprep.subr.mxu0 0.0
      %333 = vmatpush2.msra.mxu0 0.0
      %334 = vmatprep.subr.mxu0 0.0
      %335 = vmatpush2.msra.mxu0 0.0
      %336 = vmatprep.subr.mxu0 0.0
      %337 = vmatpush2.msra.mxu0 0.0
      %338 = vmatprep.subr.mxu0 0.0
      %339 = vmatpush2.msra.mxu0 0.0
      %340 = vmatprep.subr.mxu0 0.0
      %341 = vmatpush2.msra.mxu0 0.0
      %342 = vmatprep.subr.mxu0 0.0
      %343 = vmatpush2.msra.mxu0 0.0
      %344 = vmatprep.subr.mxu0 0.0
      %345 = vmatpush2.msra.mxu0 0.0
      %346 = vmatprep.subr.mxu0 0.0
      %347 = vmatpush2.msra.mxu0 0.0
      %348 = vmatprep.subr.mxu0 0.0
      %349 = vmatpush2.msra.mxu0 0.0
      %350 = vmatprep.subr.mxu0 0.0
      %351 = vmatpush2.msra.mxu0 0.0
      %352 = vmatprep.subr.mxu0 0.0
      %353 = vmatpush2.msra.mxu0 0.0
      %354 = vmatprep.mubr.f32.mxu0 0.0
      %355 = vmatmul.mubr.f32.gmra.mxu0 %v279
      %v356 = vpop.f32.mrf.mxu0
      %v357 = vadd.f32 0.0, %v356
      %v358 = vpop.f32.mrf.mxu0
      %359 = vmatprep.mubr.f32.mxu0 0.0
      %360 = vmatmul.mubr.f32.gmra.mxu0 %v282
      %v361 = vpop.f32.mrf.mxu0
      %v362 = vadd.f32 0.0, %v361
      %v363 = vpop.f32.mrf.mxu0
      %364 = vmatprep.mubr.f32.mxu0 0.0
      %365 = vmatmul.mubr.f32.gmra.mxu0 %v285
      %v366 = vpop.f32.mrf.mxu0
      %v367 = vadd.f32 0.0, %v366
      %v368 = vpop.f32.mrf.mxu0
      %369 = vmatprep.mubr.f32.mxu0 0.0
      %370 = vmatmul.mubr.f32.gmra.mxu0 %v288
      %v371 = vpop.f32.mrf.mxu0
      %v372 = vadd.f32 0.0, %v371
      %v373 = vpop.f32.mrf.mxu0
      %374 = vdwg.mxu0
      %v375 = vld [vmem:[%s1] sm:$0xff]
      %v376 = vld [vmem:[%s1 + $0x8] sm:$0xff]
      %v377 = vld [vmem:[%s248] sm:$0xff]
      %v378 = vld [vmem:[%s248 + $0x8] sm:$0xff]
      %v379 = vld [vmem:[%s248 + $0x10] sm:$0xff]
      %v380 = vld [vmem:[%s248 + $0x18] sm:$0xff]
      %382 = vset.pattern.permute.xlu0 0
      %383 = vperm.xlu0 %382, %v377
      %v384 = vpop.permute.xlu0 %383
      %387 = vset.pattern.permute.xlu0 0
      %388 = vperm.xlu0 %387, %v378
      %v389 = vpop.permute.xlu0 %388
      %392 = vset.pattern.permute.xlu0 0
      %393 = vperm.xlu0 %392, %v379
      %v394 = vpop.permute.xlu0 %393
      %397 = vset.pattern.permute.xlu0 0
      %398 = vperm.xlu0 %397, %v380
      %v399 = vpop.permute.xlu0 %398
      %vm401 = vcmask 130048
      %v403 = vsel %vm401, %v357, 0
      %v406 = vsel %vm401, %v362, 0
      %v409 = vsel %vm401, %v367, 0
      %v412 = vsel %vm401, %v372, 0
      %414 = vmatprep.subr.mxu0 0.0
      %415 = vmatpush1.msra.mxu0 0.0
      %416 = vmatprep.subr.mxu0 0.0
      %417 = vmatpush1.msra.mxu0 0.0
      %418 = vmatprep.subr.mxu0 0.0
      %419 = vmatpush1.msra.mxu0 0.0
      %420 = vmatprep.subr.mxu0 0.0
      %421 = vmatpush1.msra.mxu0 0.0
      %422 = vmatprep.subr.mxu0 0.0
      %423 = vmatpush1.msra.mxu0 0.0
      %424 = vmatprep.subr.mxu0 0.0
      %425 = vmatpush1.msra.mxu0 0.0
      %426 = vmatprep.subr.mxu0 0.0
      %427 = vmatpush1.msra.mxu0 0.0
      %428 = vmatprep.subr.mxu0 0.0
      %429 = vmatpush1.msra.mxu0 0.0
      %430 = vmatprep.subr.mxu0 0.0
      %431 = vmatpush1.msra.mxu0 0.0
      %432 = vmatprep.subr.mxu0 0.0
      %433 = vmatpush1.msra.mxu0 0.0
      %434 = vmatprep.subr.mxu0 0.0
      %435 = vmatpush1.msra.mxu0 0.0
      %436 = vmatprep.subr.mxu0 0.0
      %437 = vmatpush1.msra.mxu0 0.0
      %438 = vmatprep.subr.mxu0 0.0
      %439 = vmatpush1.msra.mxu0 0.0
      %440 = vmatprep.subr.mxu0 0.0
      %441 = vmatpush1.msra.mxu0 0.0
      %442 = vmatprep.subr.mxu0 0.0
      %443 = vmatpush1.msra.mxu0 %v376
      %444 = vmatprep.subr.mxu0 0.0
      %445 = vmatpush1.msra.mxu0 %v375
      %446 = vmatprep.subr.mxu0 0.0
      %447 = vmatpush2.msra.mxu0 0.0
      %448 = vmatprep.subr.mxu0 0.0
      %449 = vmatpush2.msra.mxu0 0.0
      %450 = vmatprep.subr.mxu0 0.0
      %451 = vmatpush2.msra.mxu0 0.0
      %452 = vmatprep.subr.mxu0 0.0
      %453 = vmatpush2.msra.mxu0 0.0
      %454 = vmatprep.subr.mxu0 0.0
      %455 = vmatpush2.msra.mxu0 0.0
      %456 = vmatprep.subr.mxu0 0.0
      %457 = vmatpush2.msra.mxu0 0.0
      %458 = vmatprep.subr.mxu0 0.0
      %459 = vmatpush2.msra.mxu0 0.0
      %460 = vmatprep.subr.mxu0 0.0
      %461 = vmatpush2.msra.mxu0 0.0
      %462 = vmatprep.subr.mxu0 0.0
      %463 = vmatpush2.msra.mxu0 0.0
      %464 = vmatprep.subr.mxu0 0.0
      %465 = vmatpush2.msra.mxu0 0.0
      %466 = vmatprep.subr.mxu0 0.0
      %467 = vmatpush2.msra.mxu0 0.0
      %468 = vmatprep.subr.mxu0 0.0
      %469 = vmatpush2.msra.mxu0 0.0
      %470 = vmatprep.subr.mxu0 0.0
      %471 = vmatpush2.msra.mxu0 0.0
      %472 = vmatprep.subr.mxu0 0.0
      %473 = vmatpush2.msra.mxu0 0.0
      %474 = vmatprep.subr.mxu0 0.0
      %475 = vmatpush2.msra.mxu0 0.0
      %476 = vmatprep.subr.mxu0 0.0
      %477 = vmatpush2.msra.mxu0 0.0
      %478 = vmatprep.mubr.f32.mxu0 0.0
      %479 = vmatmul.mubr.f32.gmra.mxu0 %v403
      %v480 = vpop.f32.mrf.mxu0
      %v481 = vadd.f32 %v384, %v480
      %v482 = vpop.f32.mrf.mxu0
      %483 = vmatprep.mubr.f32.mxu0 0.0
      %484 = vmatmul.mubr.f32.gmra.mxu0 %v406
      %v485 = vpop.f32.mrf.mxu0
      %v486 = vadd.f32 %v389, %v485
      %v487 = vpop.f32.mrf.mxu0
      %488 = vmatprep.mubr.f32.mxu0 0.0
      %489 = vmatmul.mubr.f32.gmra.mxu0 %v409
      %v490 = vpop.f32.mrf.mxu0
      %v491 = vadd.f32 %v394, %v490
      %v492 = vpop.f32.mrf.mxu0
      %493 = vmatprep.mubr.f32.mxu0 0.0
      %494 = vmatmul.mubr.f32.gmra.mxu0 %v412
      %v495 = vpop.f32.mrf.mxu0
      %v496 = vadd.f32 %v399, %v495
      %v497 = vpop.f32.mrf.mxu0
      %498 = vdwg.mxu0
      %vm499 = vcmask 31744
      %500 = vst.msk [vmem:[%s263] sm:$0xff] %vm499, %v481
      %501 = vst.msk [vmem:[%s263 + $0x8] sm:$0xff] %vm499, %v486
      %502 = vst.msk [vmem:[%s263 + $0x10] sm:$0xff] %vm499, %v491
      %503 = vst.msk [vmem:[%s263 + $0x18] sm:$0xff] %vm499, %v496
      %s504 = smul.u32 4, %s20
      %p505 = scmp.lt.s32.totalorder %s19, 1
      %s506 = scalar_select %p505, %s19, 1
      %p507 = scmp.lt.s32.totalorder %s504, 3
      %s508 = scalar_select %p507, %s504, 3
      %s509 = smul.addr %s506, 4
      %s510 = sadd.s32 %s508, %s509
      %s511 = smul.addr %s510, 8
      %s512 = scalar_lea.vmem %s4, %s511
      // Predicated region
      $region37: #{tpu_custom_call.1} parent=35 // pred_check
        %p513 = pneg %p146
      $region38: #{tpu_custom_call.1} parent=35 // pred_check_branch
        %515 = sbr.rel (%p513) target = $region40
      $region39: #{tpu_custom_call.1} parent=35 // pred_region
        %s516 = smul.u32 4, %s20
      $region40: #{tpu_custom_call.1} parent=35 // pred_fallthru
        _
    $region36: #{tpu_custom_call.1} parent=5 // pred_fallthru
      _
    %p517 = scmp.le.s32.totalorder 2, %s10
    // Predicated region
    $region41: #{tpu_custom_call.1} parent=5 // pred_check
      %p518 = pneg %p517
    $region42: #{tpu_custom_call.1} parent=5 // pred_check_branch
      %520 = sbr.rel (%p518) target = $region44
    $region43: #{tpu_custom_call.1} parent=5 // pred_region
      %s521 = ssub.s32 %s10, 2
      // Predicated region
      $region45: #{tpu_custom_call.1} parent=43 // pred_check
        %p522 = pneg %p152
      $region46: #{tpu_custom_call.1} parent=43 // pred_check_branch
        %524 = sbr.rel (%p522) target = $region48
      $region47: #{tpu_custom_call.1} parent=43 // pred_region
        %s525 = smul.u32 4, %s22
        %p526 = scmp.lt.s32.totalorder %s21, 1
        %s527 = scalar_select %p526, %s21, 1
        %p528 = scmp.lt.s32.totalorder %s525, 3
        %s529 = scalar_select %p528, %s525, 3
        %s530 = smul.addr %s527, 4
        %s531 = sadd.s32 %s529, %s530
        %s532 = smul.addr %s531, 8
        %s533 = scalar_lea.vmem %s4, %s532
      $region48: #{tpu_custom_call.1} parent=43 // pred_fallthru
        _
    $region44: #{tpu_custom_call.1} parent=5 // pred_fallthru
      _
  $region6: #{tpu_custom_call.1} parent=0 // loop_footer
    %s14 = sadd.s32 1, %s10
  $region7: #{tpu_custom_call.1} parent=0 // loop_footer_branch
    %9 = sbr.rel target = $region3
  $region8: #{tpu_custom_call.1} parent=0 // loop_exit
    _

</llo_original>
